<compile_context>
chip_gen: v5e
topology: v5e:2x2
jax: 0.10.0
libtpu: 0.0.40
codegen_flags: <defaults>
</compile_context>

<pallas_src>
import jax
import jax.numpy as jnp
from jax.experimental import pallas as pl
from jax.experimental.pallas import tpu as pltpu

LN_EPS = 1e-5  # nn.LayerNorm default


def _pooler_kernel(cls_ref, gamma_ref, beta_ref, w_ref, bias_ref, out_ref):
    # cls_ref:   (TILE_B, H)       CLS activations
    # gamma_ref: (1, H)            LayerNorm scale
    # beta_ref:  (1, H)            LayerNorm shift
    # w_ref:     (TILE_O, H)       Linear weight, PyTorch (O, H) layout
    # bias_ref:  (1, TILE_O)       Linear bias
    # out_ref:   (TILE_B, TILE_O)  output block

    # LayerNorm (recomputed per grid step; cheap and hidden under weight DMA,
    # and keeps every grid step independent so both axes can be "parallel").
    x = cls_ref[...].astype(jnp.float32)
    mean = jnp.mean(x, axis=-1, keepdims=True)
    xc = x - mean
    var = jnp.mean(xc * xc, axis=-1, keepdims=True)
    xn = xc * jax.lax.rsqrt(var + LN_EPS)
    xn = xn * gamma_ref[...].astype(jnp.float32) \
        + beta_ref[...].astype(jnp.float32)
    # Match the weight dtype so the MXU sees matched (e.g. bf16) inputs.
    xn = xn.astype(w_ref.dtype)

    # NT matmul on the MXU: (TILE_B, H) . (TILE_O, H)^T -> (TILE_B, TILE_O),
    # contracting the last axis of both operands, f32 accumulation.
    y = jax.lax.dot_general(
        xn, w_ref[...],
        dimension_numbers=(((1,), (1,)), ((), ())),
        preferred_element_type=jnp.float32,
    )
    y = y + bias_ref[...].astype(jnp.float32)
    out_ref[...] = jnp.tanh(y).astype(out_ref.dtype)


def _pick_tile(dim, candidates, bytes_per_unit, max_bytes):
    """Largest candidate that divides `dim` and fits the per-tile VMEM budget;
    otherwise the full extent (full-extent blocks are always layout-legal and
    only occur for small dims in practice)."""
    for c in candidates:
        if dim % c == 0 and c * bytes_per_unit <= max_bytes:
            return c
    return dim


def pooler_forward(x, gamma, beta, weight, bias):
    """x: (B, S, H); weight: (O, H) PyTorch layout; bias: (O,)."""
    B, S, H = x.shape
    O = weight.shape[0]

    # Tiny glue: CLS-token slice and 2-D parameter views.
    cls_rep = x[:, 0, :]               # (B, H)
    gamma2 = gamma.reshape(1, H)
    beta2 = beta.reshape(1, H)
    bias2 = bias.reshape(1, O)

    x_item = jnp.dtype(x.dtype).itemsize
    w_item = jnp.dtype(weight.dtype).itemsize
    o_item = jnp.dtype(x.dtype).itemsize

    # Tile sizes: wide, lane-dense O tiles; B tiles large enough that the
    # common case is a single B tile.  Per-tile byte budgets account for
    # double-buffering and keep the total working set well inside v7x's
    # 64 MiB physical VMEM (v5e/v6e have 128 MiB, so also fine there).
    tile_o = _pick_tile(O, (1024, 512, 256, 128),
                        bytes_per_unit=2 * H * w_item,            # weight 2x buf
                        max_bytes=24 << 20)
    tile_b = _pick_tile(B, (512, 256, 128, 64, 32, 16, 8),
                        bytes_per_unit=2 * H * x_item + 2 * tile_o * o_item,
                        max_bytes=12 << 20)

    # Weight-outer, B-inner grid: weight block index is constant across the
    # inner axis -> Pallas skips the re-DMA and the weight is read from HBM
    # exactly once.
    grid = (O // tile_o, B // tile_b)
    n_o_tiles = grid[0]

    # Double-buffered input/output blocks (no scratch needed any more).
    need = (
        2 * tile_b * H * x_item          # cls blocks
        + 2 * tile_o * H * w_item        # weight blocks
        + 2 * tile_b * tile_o * o_item   # output blocks
        + 2 * (2 * H + tile_o) * 4       # gamma/beta/bias blocks
    )
    # >= 32 MiB so v5e's 16 MiB default scoped VMEM does not reject the tiles;
    # <= 48 MiB so the budget is always legal on v7x's 64 MiB physical VMEM.
    vmem_limit = int(min(max(2 * need, 32 << 20), 48 << 20))

    cost = pl.CostEstimate(
        flops=2 * B * H * O,
        transcendentals=B * O + n_o_tiles * B,   # tanh + per-step rsqrt
        bytes_accessed=(n_o_tiles * B * H * x_item   # cls re-streamed per O tile
                        + H * O * w_item             # weight read exactly once
                        + B * O * o_item
                        + (2 * H + O) * 4),
    )

    out = pl.pallas_call(
        _pooler_kernel,
        out_shape=jax.ShapeDtypeStruct((B, O), x.dtype),
        grid=grid,
        in_specs=[
            pl.BlockSpec((tile_b, H), lambda o, b: (b, 0)),   # cls_rep
            pl.BlockSpec((1, H), lambda o, b: (0, 0)),        # gamma
            pl.BlockSpec((1, H), lambda o, b: (0, 0)),        # beta
            pl.BlockSpec((tile_o, H), lambda o, b: (o, 0)),   # weight (outer-only)
            pl.BlockSpec((1, tile_o), lambda o, b: (0, o)),   # bias
        ],
        out_specs=pl.BlockSpec((tile_b, tile_o), lambda o, b: (b, o)),
        compiler_params=pltpu.CompilerParams(
            # No cross-step state (LN recomputed per step), so both axes are
            # parallel -> v7x megacore shards the weight stream across 2 TCs.
            dimension_semantics=("parallel", "parallel"),
            vmem_limit_bytes=vmem_limit,
        ),
        cost_estimate=cost,
    )(cls_rep, gamma2, beta2, weight, bias2)
    return out


def _reference(x, gamma, beta, weight, bias):
    cls_rep = x[:, 0, :].astype(jnp.float32)
    mean = jnp.mean(cls_rep, axis=-1, keepdims=True)
    var = jnp.mean((cls_rep - mean) ** 2, axis=-1, keepdims=True)
    xn = (cls_rep - mean) / jnp.sqrt(var + LN_EPS)
    xn = xn * gamma.astype(jnp.float32) + beta.astype(jnp.float32)
    y = xn @ weight.T.astype(jnp.float32) + bias.astype(jnp.float32)
    return jnp.tanh(y).astype(x.dtype)


if __name__ == "__main__":
    # Small shapes consistent with the module's forward: x is (B, S, H)
    B, S, H, O = 2, 8, 32, 32

    key = jax.random.PRNGKey(0)
    kx, kw, kb = jax.random.split(key, 3)

    x = jax.random.normal(kx, (B, S, H), dtype=jnp.float32)

    # Deterministic parameter init (synthetic; mimics LayerNorm + Linear init).
    # NOTE: in production, feed the Linear weight in bf16 (checkpoint dtype) —
    # the kernel consumes it natively and halves the dominant HBM read; the
    # demo uses f32 only to keep a tight correctness tolerance.
    gamma = jnp.ones((H,), dtype=jnp.float32)
    beta = jnp.zeros((H,), dtype=jnp.float32)
    bound = 1.0 / jnp.sqrt(H)
    weight = jax.random.uniform(kw, (O, H), minval=-bound, maxval=bound,
                                dtype=jnp.float32)
    bias = jax.random.uniform(kb, (O,), minval=-bound, maxval=bound,
                              dtype=jnp.float32)

    out = pooler_forward(x, gamma, beta, weight, bias)
    out = jax.block_until_ready(out)

    ref = _reference(x, gamma, beta, weight, bias)
    assert out.shape == (B, O)
    assert jnp.allclose(out, ref, atol=1e-5, rtol=1e-5)

    print("KERNEL_OK")
</pallas_src>

<mosaic_0001>
module attributes {stable_mosaic.version = 11 : i64} {
  func.func @_pooler_kernel(%arg0: i32, %arg1: i32, %arg2: memref<2x32xf32, #tpu.memory_space<vmem>>, %arg3: memref<1x32xf32, #tpu.memory_space<vmem>>, %arg4: memref<1x32xf32, #tpu.memory_space<vmem>>, %arg5: memref<32x32xf32, #tpu.memory_space<vmem>>, %arg6: memref<1x32xf32, #tpu.memory_space<vmem>>, %arg7: memref<2x32xf32, #tpu.memory_space<vmem>>) attributes {dimension_semantics = [#tpu.dimension_semantics<parallel>, #tpu.dimension_semantics<parallel>], iteration_bounds = array<i64: 1, 1>, scalar_prefetch = 0 : i64, scratch_operands = 0 : i64, tpu.core_type = #tpu.core_type<tc>, window_params = [{transform_indices = @transform_0, window_bounds = array<i64: 2, 32>}, {pipeline_mode = #tpu.pipeline_mode<synchronous>, transform_indices = @transform_1, window_bounds = array<i64: 1, 32>}, {pipeline_mode = #tpu.pipeline_mode<synchronous>, transform_indices = @transform_2, window_bounds = array<i64: 1, 32>}, {transform_indices = @transform_3, window_bounds = array<i64: 32, 32>}, {transform_indices = @transform_4, window_bounds = array<i64: 1, 32>}, {transform_indices = @transform_5, window_bounds = array<i64: 2, 32>}]} {
    %c0 = arith.constant 0 : index
    %c0_0 = arith.constant 0 : index
    %0 = vector.load %arg2[%c0, %c0_0] : memref<2x32xf32, #tpu.memory_space<vmem>>, vector<2x32xf32>
    %cst = arith.constant dense<0.000000e+00> : vector<2xf32>
    %1 = vector.multi_reduction <add>, %0, %cst [1] : vector<2x32xf32> to vector<2xf32>
    %2 = vector.shape_cast %1 : vector<2xf32> to vector<2x1xf32>
    %cst_1 = arith.constant 3.200000e+01 : f32
    %3 = vector.broadcast %cst_1 : f32 to vector<2x1xf32>
    %4 = arith.divf %2, %3 : vector<2x1xf32>
    %5 = vector.broadcast %4 : vector<2x1xf32> to vector<2x32xf32>
    %6 = arith.subf %0, %5 : vector<2x32xf32>
    %7 = arith.mulf %6, %6 : vector<2x32xf32>
    %cst_2 = arith.constant dense<0.000000e+00> : vector<2xf32>
    %8 = vector.multi_reduction <add>, %7, %cst_2 [1] : vector<2x32xf32> to vector<2xf32>
    %9 = vector.shape_cast %8 : vector<2xf32> to vector<2x1xf32>
    %cst_3 = arith.constant 3.200000e+01 : f32
    %10 = vector.broadcast %cst_3 : f32 to vector<2x1xf32>
    %11 = arith.divf %9, %10 : vector<2x1xf32>
    %cst_4 = arith.constant 9.99999974E-6 : f32
    %12 = vector.broadcast %cst_4 : f32 to vector<2x1xf32>
    %13 = arith.addf %11, %12 : vector<2x1xf32>
    %14 = math.rsqrt %13 : vector<2x1xf32>
    %15 = vector.broadcast %14 : vector<2x1xf32> to vector<2x32xf32>
    %16 = arith.mulf %6, %15 : vector<2x32xf32>
    %c0_5 = arith.constant 0 : index
    %c0_6 = arith.constant 0 : index
    %17 = vector.load %arg3[%c0_5, %c0_6] : memref<1x32xf32, #tpu.memory_space<vmem>>, vector<1x32xf32>
    %18 = vector.broadcast %17 : vector<1x32xf32> to vector<2x32xf32>
    %19 = arith.mulf %16, %18 : vector<2x32xf32>
    %c0_7 = arith.constant 0 : index
    %c0_8 = arith.constant 0 : index
    %20 = vector.load %arg4[%c0_7, %c0_8] : memref<1x32xf32, #tpu.memory_space<vmem>>, vector<1x32xf32>
    %21 = vector.broadcast %20 : vector<1x32xf32> to vector<2x32xf32>
    %22 = arith.addf %19, %21 : vector<2x32xf32>
    %c0_9 = arith.constant 0 : index
    %c0_10 = arith.constant 0 : index
    %23 = vector.load %arg5[%c0_9, %c0_10] : memref<32x32xf32, #tpu.memory_space<vmem>>, vector<32x32xf32>
    %cst_11 = arith.constant dense<0.000000e+00> : vector<2x32xf32>
    %24 = tpu.matmul %22, %23, %cst_11 {dimension_numbers = #tpu.dot_dimension_numbers<[1], [1], [0], [0], [0, 0, 1, 0], [], []>} : vector<2x32xf32>, vector<32x32xf32>, vector<2x32xf32> -> vector<2x32xf32>
    %c0_12 = arith.constant 0 : index
    %c0_13 = arith.constant 0 : index
    %25 = vector.load %arg6[%c0_12, %c0_13] : memref<1x32xf32, #tpu.memory_space<vmem>>, vector<1x32xf32>
    %26 = vector.broadcast %25 : vector<1x32xf32> to vector<2x32xf32>
    %27 = arith.addf %24, %26 : vector<2x32xf32>
    %28 = math.tanh %27 : vector<2x32xf32>
    %c0_14 = arith.constant 0 : index
    %c0_15 = arith.constant 0 : index
    %29 = vector.load %arg7[%c0_14, %c0_15] : memref<2x32xf32, #tpu.memory_space<vmem>>, vector<2x32xf32>
    tpu.vector_store %arg7[%c0_14, %c0_15], %28 {strides = array<i32>} : memref<2x32xf32, #tpu.memory_space<vmem>>, vector<2x32xf32>,
    return
  }
  func.func @transform_0(%arg0: i32, %arg1: i32) -> (i32, i32) {
    %c0_i32 = arith.constant 0 : i32
    %c0_i32_0 = arith.constant 0 : i32
    return %arg1, %c0_i32 : i32, i32
  }
  func.func @transform_1(%arg0: i32, %arg1: i32) -> (i32, i32) {
    %c0_i32 = arith.constant 0 : i32
    %c0_i32_0 = arith.constant 0 : i32
    %c0_i32_1 = arith.constant 0 : i32
    return %c0_i32, %c0_i32_0 : i32, i32
  }
  func.func @transform_2(%arg0: i32, %arg1: i32) -> (i32, i32) {
    %c0_i32 = arith.constant 0 : i32
    %c0_i32_0 = arith.constant 0 : i32
    %c0_i32_1 = arith.constant 0 : i32
    return %c0_i32, %c0_i32_0 : i32, i32
  }
  func.func @transform_3(%arg0: i32, %arg1: i32) -> (i32, i32) {
    %c0_i32 = arith.constant 0 : i32
    %c0_i32_0 = arith.constant 0 : i32
    return %arg0, %c0_i32 : i32, i32
  }
  func.func @transform_4(%arg0: i32, %arg1: i32) -> (i32, i32) {
    %c0_i32 = arith.constant 0 : i32
    %c0_i32_0 = arith.constant 0 : i32
    return %c0_i32, %arg0 : i32, i32
  }
  func.func @transform_5(%arg0: i32, %arg1: i32) -> (i32, i32) {
    %c0_i32 = arith.constant 0 : i32
    return %arg1, %arg0 : i32, i32
  }
}

</mosaic_0001>

<llo_original>
// kernel: tpu_custom_call.1
$region0: #{tpu_custom_call.1}
  #allocation0 [shape = 'u32[]', space=smem, size = 0x4, offset = 0x4, fixed_abs, tag = 'smem constant byte address 0x4 - core index']
  #allocation1 [shape = 'u32[72,128]{1,0:T(1,128)}', space=vmem, size = 0x9000, scoped, tag = 'internal scratch']
  %s0 = inlined_call_operand.hbm [shape: f32[2,32], index: 0, kind: input, shape index: {}]
  %s1 = inlined_call_operand.hbm [shape: f32[1,32], index: 1, kind: input, shape index: {}]
  %s2 = inlined_call_operand.vmem [shape: f32[1,32], index: 2, kind: input, shape index: {}]
  %s3 = inlined_call_operand.hbm [shape: f32[32,32], index: 3, kind: input, shape index: {}]
  %s4 = inlined_call_operand.vmem [shape: f32[1,32], index: 4, kind: input, shape index: {}]
  %s5 = inlined_call_operand.hbm [shape: f32[2,32], index: 5, kind: output, shape index: {}]
  %s6 = sld [smem:[#allocation0]]
  $region42: #{tpu_custom_call.1} parent=0
    _
  %s8 = ssub.s32 1, %s6
  %s9 = scalar_select 0, %s8, %s6
  $region1: #{tpu_custom_call.1} parent=0
    #allocation2 [shape = 'u8[1024]{0}', space=vmem, size = 0x400, scoped, tag = 'input window, operand 0, single buffered']
    #allocation3 [shape = 's32[1]{0}', space=sflag, size = 0x4, scoped, tag = 'scoped memory for tpu_custom_call.1']
    #allocation4 [shape = 's32[1]{0}', space=sflag, size = 0x4, scoped, tag = 'scoped memory for tpu_custom_call.1']
    #allocation5 [shape = 'u8[512]{0}', space=vmem, size = 0x400, scoped, tag = 'input window, operand 1, single buffered']
    #allocation6 [shape = 's32[1]{0}', space=sflag, size = 0x4, scoped, tag = 'scoped memory for tpu_custom_call.1']
    #allocation7 [shape = 'u8[16384]{0}', space=vmem, size = 0x4000, scoped, tag = 'input window, operand 3, single buffered']
    #allocation8 [shape = 'u8[1024]{0}', space=vmem, size = 0x400, scoped, tag = 'output window, operand 0, single buffered']
    %10 = vsyncpa [#allocation3], 0
    %11 = vsyncpa [#allocation6], 0
    %12 = vsyncpa [#allocation4], 0
    // Predicated region
    $region2: #{tpu_custom_call.1} parent=1 // pred_check
      _
    $region3: #{tpu_custom_call.1} parent=1 // pred_check_branch
      %14 = sbr.rel (0) target = $region5
    $region4: #{tpu_custom_call.1} parent=1 // pred_region
      %16 = vsyncadd [#allocation3], 0
      %s18 = sshll.u32 %s0, 4
      %s19 = int_to_ptr.hbm [resolvable:$true] %s18
      %s20 = sshll.u32 [#allocation2], 4
      %s21 = int_to_ptr.vmem [resolvable:$true] %s20
      %23 = dma.hbm_to_vmem [thread:$0]  %s19, 32, %s21, [#allocation3]
    $region5: #{tpu_custom_call.1} parent=1 // pred_fallthru
      _
    // Predicated region
    $region6: #{tpu_custom_call.1} parent=1 // pred_check
      _
    $region7: #{tpu_custom_call.1} parent=1 // pred_check_branch
      %25 = sbr.rel (0) target = $region9
    $region8: #{tpu_custom_call.1} parent=1 // pred_region
      %27 = vsyncadd [#allocation6], 0
      %s29 = sshll.u32 %s1, 4
      %s30 = int_to_ptr.hbm [resolvable:$true] %s29
      %s31 = sshll.u32 [#allocation5], 4
      %s32 = int_to_ptr.vmem [resolvable:$true] %s31
      %34 = dma.hbm_to_vmem [thread:$0]  %s30, 16, %s32, [#allocation6]
    $region9: #{tpu_custom_call.1} parent=1 // pred_fallthru
      _
    // Predicated region
    $region10: #{tpu_custom_call.1} parent=1 // pred_check
      _
    $region11: #{tpu_custom_call.1} parent=1 // pred_check_branch
      %36 = sbr.rel (0) target = $region13
    $region12: #{tpu_custom_call.1} parent=1 // pred_region
      _
    $region13: #{tpu_custom_call.1} parent=1 // pred_fallthru
      _
    // Predicated region
    $region14: #{tpu_custom_call.1} parent=1 // pred_check
      _
    $region15: #{tpu_custom_call.1} parent=1 // pred_check_branch
      %38 = sbr.rel (0) target = $region17
    $region16: #{tpu_custom_call.1} parent=1 // pred_region
      %40 = vsyncadd [#allocation6], 0
      %s41 = sshll.u32 %s3, 4
      %s42 = int_to_ptr.hbm [resolvable:$true] %s41
      %s43 = sshll.u32 [#allocation7], 4
      %s44 = int_to_ptr.vmem [resolvable:$true] %s43
      %49 = dma.hbm_to_vmem [thread:$0]  %s42, 512, %s44, [#allocation6], 128, 128, 8
    $region17: #{tpu_custom_call.1} parent=1 // pred_fallthru
      _
    // Predicated region
    $region18: #{tpu_custom_call.1} parent=1 // pred_check
      _
    $region19: #{tpu_custom_call.1} parent=1 // pred_check_branch
      %51 = sbr.rel (0) target = $region21
    $region20: #{tpu_custom_call.1} parent=1 // pred_region
      _
    $region21: #{tpu_custom_call.1} parent=1 // pred_fallthru
      _
    // Predicated region
    $region22: #{tpu_custom_call.1} parent=1 // pred_check
      _
    $region23: #{tpu_custom_call.1} parent=1 // pred_check_branch
      %53 = sbr.rel (0) target = $region25
    $region24: #{tpu_custom_call.1} parent=1 // pred_region
      %55 = dma.done [#allocation3], 32
    $region25: #{tpu_custom_call.1} parent=1 // pred_fallthru
      _
    // Predicated region
    $region26: #{tpu_custom_call.1} parent=1 // pred_check
      _
    $region27: #{tpu_custom_call.1} parent=1 // pred_check_branch
      %57 = sbr.rel (0) target = $region29
    $region28: #{tpu_custom_call.1} parent=1 // pred_region
      %59 = dma.done [#allocation6], 16
    $region29: #{tpu_custom_call.1} parent=1 // pred_fallthru
      _
    // Predicated region
    $region30: #{tpu_custom_call.1} parent=1 // pred_check
      _
    $region31: #{tpu_custom_call.1} parent=1 // pred_check_branch
      %61 = sbr.rel (0) target = $region33
    $region32: #{tpu_custom_call.1} parent=1 // pred_region
      %63 = dma.done [#allocation6], 512
    $region33: #{tpu_custom_call.1} parent=1 // pred_fallthru
      _
    %v64 = vld [vmem:[#allocation2] sm:$0x3]
    %vm65 = vcmask 254976
    %v66 = vsel %vm65, %v64, 0.0
    %67 = vadd.xlane.f32.xlu0 %v66
    %v68 = vpop.xlane.xlu0 %67
    %v69 = vrcp.pop 32.0
    %v70 = vmul.f32 32.0, %v69
    %v71 = vsub.f32 1.0, %v70
    %v72 = vmul.f32 %v69, %v71
    %v73 = vadd.f32 %v69, %v72
    %vm74 = vweird.f32 %v69
    %v75 = vsel %vm74, %v69, %v73
    %v76 = vmul.f32 %v68, %v75
    %v77 = vsub.f32 %v64, %v76
    %v78 = vmul.f32 %v77, %v77
    %v79 = vsel %vm65, %v78, 0.0
    %80 = vadd.xlane.f32.xlu0 %v79
    %v81 = vpop.xlane.xlu0 %80
    %v82 = vmul.f32 %v81, %v75
    %v83 = vadd.f32 %v82, 1e-05
    %v84 = vrsqrt.pop %v83
    %v85 = vmul.f32 %v84, %v83
    %v86 = vmul.f32 %v85, %v84
    %v87 = vmul.f32 0.5, %v86
    %v88 = vsub.f32 1.5, %v87
    %v89 = vmul.f32 %v84, %v88
    %vm90 = vweird.f32 %v83
    %vm91 = vweird.f32 %v84
    %vm92 = vmor %vm90, %vm91
    %v93 = vsel %vm92, %v84, %v89
    %v94 = vmul.f32 %v77, %v93
    %v95 = vld [vmem:[#allocation5] sm:$0x1]
    %v97 = vperm.slane %v95, 0
    %v99 = vmul.f32 %v94, %v97
    %v100 = vld [vmem:[%s2] sm:$0x1]
    %v102 = vperm.slane %v100, 0
    %v104 = vadd.f32 %v99, %v102
    %v105 = vld [vmem:[#allocation7] sm:$0xff]
    %v106 = vld [vmem:[#allocation7 + $0x8] sm:$0xff]
    %v107 = vld [vmem:[#allocation7 + $0x10] sm:$0xff]
    %v108 = vld [vmem:[#allocation7 + $0x18] sm:$0xff]
    %v109 = vld [vmem:[%s4] sm:$0x1]
    %v111 = vperm.slane %v109, 0
    %vm113 = vcmask 261120
    %v115 = vsel %vm113, %v104, 0
    %v118 = vsel %vm113, %v105, 0
    %v121 = vsel %vm113, %v106, 0
    %v124 = vsel %vm113, %v107, 0
    %v127 = vsel %vm113, %v108, 0
    %129 = vmatpush.xpose.msra.mxu0 0.0
    %130 = vmatpush.xpose.msra.mxu0 0.0
    %131 = vmatpush.xpose.msra.mxu0 0.0
    %132 = vmatpush.xpose.msra.mxu0 0.0
    %133 = vmatpush.xpose.msra.mxu0 0.0
    %134 = vmatpush.xpose.msra.mxu0 0.0
    %135 = vmatpush.xpose.msra.mxu0 0.0
    %136 = vmatpush.xpose.msra.mxu0 0.0
    %137 = vmatpush.xpose.msra.mxu0 0.0
    %138 = vmatpush.xpose.msra.mxu0 0.0
    %139 = vmatpush.xpose.msra.mxu0 0.0
    %140 = vmatpush.xpose.msra.mxu0 0.0
    %141 = vmatpush.xpose.msra.mxu0 %v127
    %142 = vmatpush.xpose.msra.mxu0 %v124
    %143 = vmatpush.xpose.msra.mxu0 %v121
    %144 = vmatpush.xpose.msra.mxu0 %v118
    %145 = vmatmul.f32.gmra.mxu0 %v115
    %v146 = vpop.f32.mrf.mxu0
    %v147 = vadd.f32 %v111, %v146
    %148 = vdwg.mxu0
    %v149 = vtanh.pop %v147
    %150 = vst.msk [vmem:[#allocation8] sm:$0x3] %vm65, %v149
    // Predicated region
    $region34: #{tpu_custom_call.1} parent=1 // pred_check
      _
    $region35: #{tpu_custom_call.1} parent=1 // pred_check_branch
      %152 = sbr.rel (0) target = $region37
    $region36: #{tpu_custom_call.1} parent=1 // pred_region
      %154 = vsyncadd [#allocation4], 0
      %s156 = sshll.u32 [#allocation8], 4
      %s157 = int_to_ptr.vmem [resolvable:$true] %s156
      %s158 = sshll.u32 %s5, 4
      %s159 = int_to_ptr.hbm [resolvable:$true] %s158
      %161 = dma.vmem_to_hbm [thread:$0]  %s157, 32, %s159, [#allocation4]
    $region37: #{tpu_custom_call.1} parent=1 // pred_fallthru
      _
    // Predicated region
    $region38: #{tpu_custom_call.1} parent=1 // pred_check
      _
    $region39: #{tpu_custom_call.1} parent=1 // pred_check_branch
      %163 = sbr.rel (0) target = $region41
    $region40: #{tpu_custom_call.1} parent=1 // pred_region
      %165 = dma.done [#allocation4], 32
    $region41: #{tpu_custom_call.1} parent=1 // pred_fallthru
      _
    %166 = vsyncpa [#allocation3], 1
    %167 = vsyncpa [#allocation6], 1
    %168 = vsyncpa [#allocation4], 1

</llo_original>
